<compile_context>
chip_gen: v6e
topology: v6e:2x2x1
jax: 0.10.0
libtpu: 0.0.40
codegen_flags: <defaults>
</compile_context>

<pallas_src>
import jax
import jax.numpy as jnp
from jax import lax
from jax.experimental import pallas as pl
from jax.experimental.pallas import tpu as pltpu


TILE_N_MAX = 512    # batch-axis tile (lane-dense, multiple of 128)
TILE_K_MAX = 1024   # feature-axis (reduction) tile


def _round_up(v, m):
    return ((v + m - 1) // m) * m


def lr_forward_kernel(b_ref, w_ref, x_ref, o_ref, acc_ref):
    """Grid = (n_tiles, k_tiles); k (reduction over `dim`) is the last axis."""
    k = pl.program_id(1)
    nk = pl.num_programs(1)

    @pl.when(k == 0)
    def _init():
        acc_ref[...] = jnp.zeros_like(acc_ref)

    # Partial z for this dim-tile: (1, TILE_K) @ (TILE_K, TILE_N) -> (1, TILE_N).
    acc_ref[...] += jnp.dot(
        w_ref[...], x_ref[...], preferred_element_type=jnp.float32
    )

    @pl.when(k == nk - 1)
    def _finish():
        z = acc_ref[...] + b_ref[0, 0]
        # Numerically stable sigmoid: exp(-|z|) never overflows.
        e = jnp.exp(-jnp.abs(z))
        s = pl.reciprocal(1.0 + e, approx=False)
        o_ref[...] = jnp.where(z >= 0.0, s, 1.0 - s).astype(o_ref.dtype)


def lr_forward(w, b, x):
    """w: (dim, 1) f32, b: scalar f32, x: (dim, N) f32 -> (1, N) f32."""
    dim, n = x.shape
    assert w.shape == (dim, 1), w.shape

    # Tile sizes + padded (tile-aligned) extents.
    tile_n = min(TILE_N_MAX, _round_up(n, 128))
    n_pad = _round_up(n, tile_n)
    tile_k = TILE_K_MAX if dim > TILE_K_MAX else _round_up(dim, 8)
    k_pad = _round_up(dim, tile_k)

    # Zero-pad inputs (zero feature rows contribute 0 to the dot product);
    # w is passed lane-dense as (1, k_pad).
    x_p = jnp.pad(x.astype(jnp.float32), ((0, k_pad - dim), (0, n_pad - n)))
    w_row = jnp.pad(
        jnp.reshape(w.astype(jnp.float32), (1, dim)), ((0, 0), (0, k_pad - dim))
    )
    b2d = jnp.reshape(jnp.asarray(b, jnp.float32), (1, 1))

    grid = (n_pad // tile_n, k_pad // tile_k)

    out_padded = pl.pallas_call(
        lr_forward_kernel,
        out_shape=jax.ShapeDtypeStruct((1, n_pad), jnp.float32),
        grid=grid,
        in_specs=[
            # b: (1,1) scalar in SMEM, same block every step.
            pl.BlockSpec((1, 1), lambda i, k: (0, 0),
                         memory_space=pltpu.MemorySpace.SMEM),
            # w: (1, TILE_K) lane-dense row, indexed by the reduction step.
            pl.BlockSpec((1, tile_k), lambda i, k: (0, k)),
            # x: (TILE_K, TILE_N) streamed tiles.
            pl.BlockSpec((tile_k, tile_n), lambda i, k: (k, i)),
        ],
        # Output block stays resident across the reduction axis; written once
        # at the last k step.
        out_specs=pl.BlockSpec((1, tile_n), lambda i, k: (0, i)),
        scratch_shapes=[pltpu.VMEM((1, tile_n), jnp.float32)],
        compiler_params=pltpu.CompilerParams(
            dimension_semantics=("parallel", "arbitrary"),
        ),
        cost_estimate=pl.CostEstimate(
            flops=2 * dim * n,
            transcendentals=n,
            bytes_accessed=4 * (dim * n + dim + 2 * n),
        ),
    )(b2d, w_row, x_p)

    return out_padded[:, :n]


if __name__ == "__main__":
    key = jax.random.PRNGKey(0)
    kx, kw, kb, kx2, kw2 = jax.random.split(key, 5)

    # Small demo shape consistent with the module: dim flattened features, N samples.
    dim, n = 32, 8
    w = 0.1 * jax.random.normal(kw, (dim, 1), dtype=jnp.float32)
    b = 0.1 * jax.random.normal(kb, (), dtype=jnp.float32)
    x = jax.random.normal(kx, (dim, n), dtype=jnp.float32)

    out = jax.block_until_ready(lr_forward(w, b, x))
    ref = jax.nn.sigmoid(
        jnp.dot(w.T, x, precision=jax.lax.Precision.HIGHEST) + b)
    assert out.shape == (1, n), out.shape
    assert jnp.allclose(out, ref, atol=1e-5, rtol=1e-5), (out, ref)

    # Second check exercising the multi-tile grid + K accumulator path.
    dim2, n2 = 2048, 640
    w2 = 0.05 * jax.random.normal(kw2, (dim2, 1), dtype=jnp.float32)
    b2 = jnp.float32(0.25)
    x2 = jax.random.normal(kx2, (dim2, n2), dtype=jnp.float32)

    out2 = jax.block_until_ready(lr_forward(w2, b2, x2))
    ref2 = jax.nn.sigmoid(
        jnp.dot(w2.T, x2, precision=jax.lax.Precision.HIGHEST) + b2)
    assert out2.shape == (1, n2), out2.shape
    assert jnp.allclose(out2, ref2, atol=1e-5, rtol=1e-5)

    print("KERNEL_OK")
</pallas_src>

<mosaic_0001>
module attributes {stable_mosaic.version = 11 : i64} {
  func.func @lr_forward_kernel(%arg0: i32, %arg1: i32, %arg2: memref<1x1xf32, #tpu.memory_space<smem>>, %arg3: memref<1x32xf32, #tpu.memory_space<vmem>>, %arg4: memref<32x128xf32, #tpu.memory_space<vmem>>, %arg5: memref<1x128xf32, #tpu.memory_space<vmem>>, %arg6: memref<1x128xf32, #tpu.memory_space<vmem>>) attributes {dimension_semantics = [#tpu.dimension_semantics<parallel>, #tpu.dimension_semantics<arbitrary>], iteration_bounds = array<i64: 1, 1>, scalar_prefetch = 0 : i64, scratch_operands = 1 : i64, tpu.core_type = #tpu.core_type<tc>, window_params = [{transform_indices = @transform_0, window_bounds = array<i64: 1, 1>}, {transform_indices = @transform_1, window_bounds = array<i64: 1, 32>}, {transform_indices = @transform_2, window_bounds = array<i64: 32, 128>}, {transform_indices = @transform_3, window_bounds = array<i64: 1, 128>}]} {
    %c0_i32 = arith.constant 0 : i32
    %0 = arith.cmpi eq, %arg1, %c0_i32 : i32
    %1 = arith.extui %0 : i1 to i32
    %c0_i32_0 = arith.constant 0 : i32
    %2 = arith.cmpi ne, %1, %c0_i32_0 : i32
    scf.if %2 {
      %cst_10 = arith.constant 0.000000e+00 : f32
      %12 = vector.broadcast %cst_10 : f32 to vector<1x128xf32>
      %c0_11 = arith.constant 0 : index
      %c0_12 = arith.constant 0 : index
      %13 = vector.load %arg6[%c0_11, %c0_12] : memref<1x128xf32, #tpu.memory_space<vmem>>, vector<1x128xf32>
      tpu.vector_store %arg6[%c0_11, %c0_12], %12 {strides = array<i32>} : memref<1x128xf32, #tpu.memory_space<vmem>>, vector<1x128xf32>,
    } else {
    }
    %c0 = arith.constant 0 : index
    %c0_1 = arith.constant 0 : index
    %3 = vector.load %arg6[%c0, %c0_1] : memref<1x128xf32, #tpu.memory_space<vmem>>, vector<1x128xf32>
    %c0_2 = arith.constant 0 : index
    %c0_3 = arith.constant 0 : index
    %4 = vector.load %arg3[%c0_2, %c0_3] : memref<1x32xf32, #tpu.memory_space<vmem>>, vector<1x32xf32>
    %c0_4 = arith.constant 0 : index
    %c0_5 = arith.constant 0 : index
    %5 = vector.load %arg4[%c0_4, %c0_5] : memref<32x128xf32, #tpu.memory_space<vmem>>, vector<32x128xf32>
    %cst = arith.constant dense<0.000000e+00> : vector<1x128xf32>
    %6 = tpu.matmul %4, %5, %cst {dimension_numbers = #tpu.dot_dimension_numbers<[1], [0], [0], [1], [0, 0, 1, 1], [], []>} : vector<1x32xf32>, vector<32x128xf32>, vector<1x128xf32> -> vector<1x128xf32>
    %7 = arith.addf %3, %6 : vector<1x128xf32>
    %c0_6 = arith.constant 0 : index
    %c0_7 = arith.constant 0 : index
    %8 = vector.load %arg6[%c0_6, %c0_7] : memref<1x128xf32, #tpu.memory_space<vmem>>, vector<1x128xf32>
    tpu.vector_store %arg6[%c0_6, %c0_7], %7 {strides = array<i32>} : memref<1x128xf32, #tpu.memory_space<vmem>>, vector<1x128xf32>,
    %c0_i32_8 = arith.constant 0 : i32
    %9 = arith.cmpi eq, %arg1, %c0_i32_8 : i32
    %10 = arith.extui %9 : i1 to i32
    %c0_i32_9 = arith.constant 0 : i32
    %11 = arith.cmpi ne, %10, %c0_i32_9 : i32
    scf.if %11 {
      %c0_10 = arith.constant 0 : index
      %c0_11 = arith.constant 0 : index
      %12 = vector.load %arg6[%c0_10, %c0_11] : memref<1x128xf32, #tpu.memory_space<vmem>>, vector<1x128xf32>
      %c0_12 = arith.constant 0 : index
      %c0_13 = arith.constant 0 : index
      %13 = memref.load %arg2[%c0_12, %c0_13] : memref<1x1xf32, #tpu.memory_space<smem>>
      %14 = vector.broadcast %13 : f32 to vector<1x128xf32>
      %15 = arith.addf %12, %14 : vector<1x128xf32>
      %16 = math.absf %15 : vector<1x128xf32>
      %cst_14 = arith.constant 0.000000e+00 : f32
      %17 = vector.broadcast %cst_14 : f32 to vector<1x128xf32>
      %18 = arith.subf %17, %16 : vector<1x128xf32>
      %19 = math.exp %18 : vector<1x128xf32>
      %cst_15 = arith.constant 1.000000e+00 : f32
      %20 = vector.broadcast %cst_15 : f32 to vector<1x128xf32>
      %21 = arith.addf %20, %19 : vector<1x128xf32>
      %22 = tpu.reciprocal %21 : vector<1x128xf32> -> vector<1x128xf32>
      %cst_16 = arith.constant 0.000000e+00 : f32
      %23 = vector.broadcast %cst_16 : f32 to vector<1x128xf32>
      %24 = arith.cmpf oge, %15, %23 : vector<1x128xf32>
      %cst_17 = arith.constant 1.000000e+00 : f32
      %25 = vector.broadcast %cst_17 : f32 to vector<1x128xf32>
      %26 = arith.subf %25, %22 : vector<1x128xf32>
      %27 = arith.select %24, %22, %26 : vector<1x128xi1>, vector<1x128xf32>
      %c0_18 = arith.constant 0 : index
      %c0_19 = arith.constant 0 : index
      %28 = vector.load %arg5[%c0_18, %c0_19] : memref<1x128xf32, #tpu.memory_space<vmem>>, vector<1x128xf32>
      tpu.vector_store %arg5[%c0_18, %c0_19], %27 {strides = array<i32>} : memref<1x128xf32, #tpu.memory_space<vmem>>, vector<1x128xf32>,
    } else {
    }
    return
  }
  func.func @transform_0(%arg0: i32, %arg1: i32) -> (i32, i32) {
    %c0_i32 = arith.constant 0 : i32
    %c0_i32_0 = arith.constant 0 : i32
    %c0_i32_1 = arith.constant 0 : i32
    return %c0_i32, %c0_i32_0 : i32, i32
  }
  func.func @transform_1(%arg0: i32, %arg1: i32) -> (i32, i32) {
    %c0_i32 = arith.constant 0 : i32
    %c0_i32_0 = arith.constant 0 : i32
    return %c0_i32, %arg1 : i32, i32
  }
  func.func @transform_2(%arg0: i32, %arg1: i32) -> (i32, i32) {
    %c0_i32 = arith.constant 0 : i32
    return %arg1, %arg0 : i32, i32
  }
  func.func @transform_3(%arg0: i32, %arg1: i32) -> (i32, i32) {
    %c0_i32 = arith.constant 0 : i32
    %c0_i32_0 = arith.constant 0 : i32
    return %c0_i32, %arg0 : i32, i32
  }
}

</mosaic_0001>

<llo_original>
// kernel: tpu_custom_call.1
$region0: #{tpu_custom_call.1}
  #allocation0 [shape = 'u32[]', space=smem, size = 0x4, offset = 0x4, fixed_abs, tag = 'smem constant byte address 0x4 - core index']
  #allocation1 [shape = 'u32[144,128]{1,0:T(1,128)}', space=vmem, size = 0x12000, scoped, tag = 'internal scratch']
  #allocation2 [shape = 'f32[1,128]{1,0:T(1,128)}', space=vmem, size = 0x200, scoped, tag = 'scratch operand']
  #allocation3 [shape = 'f32[1,1]{1,0:T(1,128)S(6)}', space=smem, size = 0x200, scoped, tag = 'scoped memory for tpu_custom_call.1']
  %s0 = inlined_call_operand.<no memory space> [shape: f32[1,1], index: 0, kind: input, shape index: {}]
  %s1 = inlined_call_operand.vmem [shape: f32[1,32], index: 1, kind: input, shape index: {}]
  %s2 = inlined_call_operand.hbm [shape: f32[32,128], index: 2, kind: input, shape index: {}]
  %s3 = inlined_call_operand.hbm [shape: f32[1,128], index: 3, kind: output, shape index: {}]
  %s4 = sld [smem:[#allocation0]]
  $region34: #{tpu_custom_call.1} parent=0
    _
  %s6 = ssub.s32 1, %s4
  %s7 = scalar_select 0, %s6, %s4
  %8 = sst [smem:[#allocation3]] %s0
  $region1: #{tpu_custom_call.1} parent=0
    #allocation4 [shape = 'u8[16384]{0}', space=vmem, size = 0x4000, scoped, tag = 'input window, operand 2, single buffered']
    #allocation5 [shape = 's32[1]{0}', space=sflag, size = 0x4, scoped, tag = 'scoped memory for tpu_custom_call.1']
    #allocation6 [shape = 's32[1]{0}', space=sflag, size = 0x4, scoped, tag = 'scoped memory for tpu_custom_call.1']
    #allocation7 [shape = 'u8[512]{0}', space=vmem, size = 0x400, scoped, tag = 'output window, operand 0, single buffered']
    %9 = vsyncpa [#allocation5], 0
    %10 = vsyncpa [#allocation6], 0
    // Predicated region
    $region2: #{tpu_custom_call.1} parent=1 // pred_check
      _
    $region3: #{tpu_custom_call.1} parent=1 // pred_check_branch
      %12 = sbr.rel (0) target = $region5
    $region4: #{tpu_custom_call.1} parent=1 // pred_region
      _
    $region5: #{tpu_custom_call.1} parent=1 // pred_fallthru
      _
    // Predicated region
    $region6: #{tpu_custom_call.1} parent=1 // pred_check
      _
    $region7: #{tpu_custom_call.1} parent=1 // pred_check_branch
      %14 = sbr.rel (0) target = $region9
    $region8: #{tpu_custom_call.1} parent=1 // pred_region
      _
    $region9: #{tpu_custom_call.1} parent=1 // pred_fallthru
      _
    // Predicated region
    $region10: #{tpu_custom_call.1} parent=1 // pred_check
      _
    $region11: #{tpu_custom_call.1} parent=1 // pred_check_branch
      %16 = sbr.rel (0) target = $region13
    $region12: #{tpu_custom_call.1} parent=1 // pred_region
      %s18 = ssub.s32 512, 512
      %19 = vsyncadd [#allocation5], %s18
      %s20 = sshll.u32 [#allocation4], 4
      %s21 = int_to_ptr.vmem [resolvable:$true] %s20
      %26 = dma.hbm_to_vmem [thread:$0]  %s2, 512, %s21, [#allocation5], 128, 128, 8
    $region13: #{tpu_custom_call.1} parent=1 // pred_fallthru
      _
    // Predicated region
    $region14: #{tpu_custom_call.1} parent=1 // pred_check
      _
    $region15: #{tpu_custom_call.1} parent=1 // pred_check_branch
      %28 = sbr.rel (0) target = $region17
    $region16: #{tpu_custom_call.1} parent=1 // pred_region
      %29 = dma.done [#allocation5], 512
    $region17: #{tpu_custom_call.1} parent=1 // pred_fallthru
      _
    %p30 = scmp.eq.s32.totalorder 0, 0
    // Predicated region
    $region18: #{tpu_custom_call.1} parent=1 // pred_check
      %p31 = pneg %p30
    $region19: #{tpu_custom_call.1} parent=1 // pred_check_branch
      %33 = sbr.rel (%p31) target = $region21
    $region20: #{tpu_custom_call.1} parent=1 // pred_region
      %34 = vst [vmem:[#allocation2] sm:$0x1] 0.0
    $region21: #{tpu_custom_call.1} parent=1 // pred_fallthru
      _
    %v35 = vld [vmem:[#allocation2] sm:$0x1]
    %v36 = vld [vmem:[%s1] sm:$0x1]
    %v37 = vld [vmem:[#allocation4] sm:$0xff]
    %v38 = vld [vmem:[#allocation4 + $0x8] sm:$0xff]
    %v39 = vld [vmem:[#allocation4 + $0x10] sm:$0xff]
    %v40 = vld [vmem:[#allocation4 + $0x18] sm:$0xff]
    %vm41 = vcmask 261120
    %v43 = vsel %vm41, %v36, 0
    %45 = vmatprep.subr.mxu0 0.0
    %46 = vmatpush1.msra.mxu0 0.0
    %47 = vmatprep.subr.mxu0 0.0
    %48 = vmatpush1.msra.mxu0 0.0
    %49 = vmatprep.subr.mxu0 0.0
    %50 = vmatpush1.msra.mxu0 0.0
    %51 = vmatprep.subr.mxu0 0.0
    %52 = vmatpush1.msra.mxu0 0.0
    %53 = vmatprep.subr.mxu0 0.0
    %54 = vmatpush1.msra.mxu0 0.0
    %55 = vmatprep.subr.mxu0 0.0
    %56 = vmatpush1.msra.mxu0 0.0
    %57 = vmatprep.subr.mxu0 0.0
    %58 = vmatpush1.msra.mxu0 0.0
    %59 = vmatprep.subr.mxu0 0.0
    %60 = vmatpush1.msra.mxu0 0.0
    %61 = vmatprep.subr.mxu0 0.0
    %62 = vmatpush1.msra.mxu0 0.0
    %63 = vmatprep.subr.mxu0 0.0
    %64 = vmatpush1.msra.mxu0 0.0
    %65 = vmatprep.subr.mxu0 0.0
    %66 = vmatpush1.msra.mxu0 0.0
    %67 = vmatprep.subr.mxu0 0.0
    %68 = vmatpush1.msra.mxu0 0.0
    %69 = vmatprep.subr.mxu0 0.0
    %70 = vmatpush1.msra.mxu0 %v40
    %71 = vmatprep.subr.mxu0 0.0
    %72 = vmatpush1.msra.mxu0 %v39
    %73 = vmatprep.subr.mxu0 0.0
    %74 = vmatpush1.msra.mxu0 %v38
    %75 = vmatprep.subr.mxu0 0.0
    %76 = vmatpush1.msra.mxu0 %v37
    %77 = vmatprep.subr.mxu0 0.0
    %78 = vmatpush2.msra.mxu0 0.0
    %79 = vmatprep.subr.mxu0 0.0
    %80 = vmatpush2.msra.mxu0 0.0
    %81 = vmatprep.subr.mxu0 0.0
    %82 = vmatpush2.msra.mxu0 0.0
    %83 = vmatprep.subr.mxu0 0.0
    %84 = vmatpush2.msra.mxu0 0.0
    %85 = vmatprep.subr.mxu0 0.0
    %86 = vmatpush2.msra.mxu0 0.0
    %87 = vmatprep.subr.mxu0 0.0
    %88 = vmatpush2.msra.mxu0 0.0
    %89 = vmatprep.subr.mxu0 0.0
    %90 = vmatpush2.msra.mxu0 0.0
    %91 = vmatprep.subr.mxu0 0.0
    %92 = vmatpush2.msra.mxu0 0.0
    %93 = vmatprep.subr.mxu0 0.0
    %94 = vmatpush2.msra.mxu0 0.0
    %95 = vmatprep.subr.mxu0 0.0
    %96 = vmatpush2.msra.mxu0 0.0
    %97 = vmatprep.subr.mxu0 0.0
    %98 = vmatpush2.msra.mxu0 0.0
    %99 = vmatprep.subr.mxu0 0.0
    %100 = vmatpush2.msra.mxu0 0.0
    %101 = vmatprep.subr.mxu0 0.0
    %102 = vmatpush2.msra.mxu0 0.0
    %103 = vmatprep.subr.mxu0 0.0
    %104 = vmatpush2.msra.mxu0 0.0
    %105 = vmatprep.subr.mxu0 0.0
    %106 = vmatpush2.msra.mxu0 0.0
    %107 = vmatprep.subr.mxu0 0.0
    %108 = vmatpush2.msra.mxu0 0.0
    %109 = vmatprep.mubr.f32.mxu0 0.0
    %110 = vmatmul.mubr.f32.gmra.mxu0 %v43
    %v111 = vpop.f32.mrf.mxu0
    %v112 = vadd.f32 0.0, %v111
    %v113 = vpop.f32.mrf.mxu0
    %114 = vdwg.mxu0
    %v115 = vadd.f32 %v35, %v112
    %116 = vst [vmem:[#allocation2] sm:$0x1] %v115
    // Predicated region
    $region22: #{tpu_custom_call.1} parent=1 // pred_check
      %p117 = pneg %p30
    $region23: #{tpu_custom_call.1} parent=1 // pred_check_branch
      %119 = sbr.rel (%p117) target = $region25
    $region24: #{tpu_custom_call.1} parent=1 // pred_region
      %v120 = vld [vmem:[#allocation2] sm:$0x1]
      %s121 = sld [smem:[#allocation3]]
      %v122 = vstv %s121
      %v123 = vadd.f32 %v120, %v122
      %v124 = vand.u32 2147483647, %v123
      %v125 = vsub.f32 0.0, %v124
      %v126 = vmul.f32 %v125, 1.442695
      %v127 = vpow.pop %v126
      %v128 = vadd.f32 %v127, 1.0
      %v129 = vrcp.pop %v128
      %vm130 = vcmp.ge.f32.partialorder %v123, 0.0
      %v131 = vsub.f32 1.0, %v129
      %v132 = vsel %vm130, %v129, %v131
      %133 = vst [vmem:[#allocation7] sm:$0x1] %v132
    $region25: #{tpu_custom_call.1} parent=1 // pred_fallthru
      _
    // Predicated region
    $region26: #{tpu_custom_call.1} parent=1 // pred_check
      _
    $region27: #{tpu_custom_call.1} parent=1 // pred_check_branch
      %135 = sbr.rel (0) target = $region29
    $region28: #{tpu_custom_call.1} parent=1 // pred_region
      %s137 = ssub.s32 16, 16
      %138 = vsyncadd [#allocation6], %s137
      %s140 = sshll.u32 [#allocation7], 4
      %s141 = int_to_ptr.vmem [resolvable:$true] %s140
      %143 = dma.vmem_to_hbm [thread:$0]  %s141, 16, %s3, [#allocation6]
    $region29: #{tpu_custom_call.1} parent=1 // pred_fallthru
      _
    // Predicated region
    $region30: #{tpu_custom_call.1} parent=1 // pred_check
      _
    $region31: #{tpu_custom_call.1} parent=1 // pred_check_branch
      %145 = sbr.rel (0) target = $region33
    $region32: #{tpu_custom_call.1} parent=1 // pred_region
      %146 = dma.done [#allocation6], 16
    $region33: #{tpu_custom_call.1} parent=1 // pred_fallthru
      _
    %147 = vsyncpa [#allocation5], 1
    %148 = vsyncpa [#allocation6], 1

</llo_original>
